<compile_context>
chip_gen: v5e
topology: v5e:2x2
jax: 0.10.0
libtpu: 0.0.40
codegen_flags: <defaults>
</compile_context>

<pallas_src>
import math

import jax
import jax.numpy as jnp
from jax.experimental import pallas as pl
from jax.experimental.pallas import tpu as pltpu


def _round_up(a: int, b: int) -> int:
    return -(-a // b) * b


# ---------------------------------------------------------------------------
# Kernels
# ---------------------------------------------------------------------------
def _gcn_kernel_aggregate_then_project(adj_ref, x_ref, w_ref, b_ref, o_ref, acc_ref):
    """Fin <= Fout path:  acc += adj_tile @ x_tile  ;  finalize: out = acc @ W + b."""
    k = pl.program_id(2)

    @pl.when(k == 0)
    def _():
        acc_ref[...] = jnp.zeros_like(acc_ref)

    bt = adj_ref.shape[0]
    for bi in range(bt):  # static unroll over the (small) batch tile
        acc_ref[bi] += jnp.dot(
            adj_ref[bi], x_ref[bi], preferred_element_type=jnp.float32
        )

    @pl.when(k == pl.num_programs(2) - 1)
    def _():
        w32 = w_ref[...].astype(jnp.float32)   # tiny, one-shot f32 projection
        b32 = b_ref[...]                       # (1, Foutp), f32
        for bi in range(bt):
            proj = jnp.dot(acc_ref[bi], w32, preferred_element_type=jnp.float32)
            o_ref[bi] = (proj + b32).astype(o_ref.dtype)


def _gcn_kernel_project_then_aggregate(adj_ref, x_ref, w_ref, b_ref, o_ref, acc_ref):
    """Fout < Fin path:  support_k = x_k @ W ;  acc += adj_tile @ support_k."""
    k = pl.program_id(2)

    @pl.when(k == 0)
    def _():
        acc_ref[...] = jnp.zeros_like(acc_ref)

    bt = adj_ref.shape[0]
    for bi in range(bt):
        support = jnp.dot(x_ref[bi], w_ref[...], preferred_element_type=jnp.float32)
        acc_ref[bi] += jnp.dot(
            adj_ref[bi], support.astype(adj_ref.dtype),
            preferred_element_type=jnp.float32,
        )

    @pl.when(k == pl.num_programs(2) - 1)
    def _():
        for bi in range(bt):
            o_ref[bi] = (acc_ref[bi] + b_ref[...]).astype(o_ref.dtype)


# ---------------------------------------------------------------------------
# Wrapper
# ---------------------------------------------------------------------------
def graph_convolution(
    x,
    adj,
    weight,
    bias=None,
    *,
    tile: int = 512,                  # sized for v7x's 64 MiB/TC VMEM (bf16 tile = 512 KiB)
    batch_tile: int | None = None,
    compute_dtype=jnp.bfloat16,
):
    # 2-D input branch of the original module: the same graph is replicated
    # `input.shape[0]` times in the output.
    if x.ndim == 2:
        rep = x.shape[0]
        out = graph_convolution(
            x[None], adj[None], weight, bias,
            tile=tile, batch_tile=1, compute_dtype=compute_dtype,
        )[0]
        return jnp.broadcast_to(out, (rep,) + out.shape)

    B, N, Fin = x.shape
    Fin_w, Fout = weight.shape
    assert Fin_w == Fin, "weight shape mismatch"
    out_dtype = x.dtype

    LANE = 128
    # Node-dimension tile (divides the padded node dim, multiple of 128).
    T = min(_round_up(max(tile, LANE), LANE), _round_up(N, LANE))
    Np = _round_up(N, T)
    Finp = _round_up(Fin, LANE)
    Foutp = _round_up(Fout, LANE)   # lane-dense output tile

    # Pack several batch elements per grid step for small graphs.
    if batch_tile is None:
        batch_tile = B if (Np <= 256 and B <= 8) else 1
    bt = batch_tile if (batch_tile > 0 and B % batch_tile == 0) else 1

    # Cast MXU operands to bf16 (f32 accumulation inside the kernel) and pad.
    x_p = jnp.pad(x.astype(compute_dtype), ((0, 0), (0, Np - N), (0, Finp - Fin)))
    a_p = jnp.pad(adj.astype(compute_dtype), ((0, 0), (0, Np - N), (0, Np - N)))
    w_p = jnp.pad(weight.astype(compute_dtype), ((0, Finp - Fin), (0, Foutp - Fout)))
    b_vec = jnp.zeros((Fout,), jnp.float32) if bias is None else bias.astype(jnp.float32)
    b_p = jnp.pad(b_vec, (0, Foutp - Fout)).reshape(1, Foutp)

    # Pick matmul ordering by the narrower feature dimension.
    path_a = Fin <= Fout
    Facc = Finp if path_a else Foutp
    kernel = _gcn_kernel_aggregate_then_project if path_a else _gcn_kernel_project_then_aggregate

    grid = (B // bt, Np // T, Np // T)   # (batch, row-tile, k) — k last, "arbitrary"

    # VMEM estimate: double-buffered adj / x / W / bias / out tiles + accumulator.
    cbytes = jnp.dtype(compute_dtype).itemsize
    obytes = jnp.dtype(out_dtype).itemsize
    vmem_est = (
        2 * bt * T * T * cbytes
        + 2 * bt * T * Finp * cbytes
        + 2 * Finp * Foutp * cbytes
        + 2 * Foutp * 4
        + 2 * bt * T * Foutp * obytes
        + bt * T * Facc * 4
    )
    vmem_limit = int(min(max(4 * vmem_est, 16 * 1024 * 1024), 64 * 1024 * 1024))

    out_p = pl.pallas_call(
        kernel,
        out_shape=jax.ShapeDtypeStruct((B, Np, Foutp), out_dtype),
        grid_spec=pltpu.PrefetchScalarGridSpec(
            num_scalar_prefetch=0,
            grid=grid,
            in_specs=[
                pl.BlockSpec((bt, T, T), lambda b, i, k: (b, i, k)),      # adj tile
                pl.BlockSpec((bt, T, Finp), lambda b, i, k: (b, k, 0)),   # x k-tile
                pl.BlockSpec((Finp, Foutp), lambda b, i, k: (0, 0)),      # W (resident)
                pl.BlockSpec((1, Foutp), lambda b, i, k: (0, 0)),         # bias (resident)
            ],
            out_specs=pl.BlockSpec((bt, T, Foutp), lambda b, i, k: (b, i, 0)),
            scratch_shapes=[pltpu.VMEM((bt, T, Facc), jnp.float32)],
        ),
        compiler_params=pltpu.CompilerParams(
            dimension_semantics=("parallel", "parallel", "arbitrary"),
            vmem_limit_bytes=vmem_limit,
        ),
    )(a_p, x_p, w_p, b_p)

    return out_p[:, :N, :Fout]


# ---------------------------------------------------------------------------
# Demo / correctness check
# ---------------------------------------------------------------------------
if __name__ == "__main__":
    B, N = 2, 16
    in_features, out_features = 8, 32

    key = jax.random.PRNGKey(0)
    kx, kadj, kw, kb = jax.random.split(key, 4)

    x = jax.random.normal(kx, (B, N, in_features), dtype=jnp.float32)
    adj = jax.random.uniform(kadj, (B, N, N), dtype=jnp.float32)

    # reset_parameters(): uniform(-stdv, stdv) with stdv = 1/sqrt(out_features)
    stdv = 1.0 / math.sqrt(out_features)
    weight = jax.random.uniform(
        kw, (in_features, out_features), dtype=jnp.float32, minval=-stdv, maxval=stdv
    )
    bias = jax.random.uniform(
        kb, (out_features,), dtype=jnp.float32, minval=-stdv, maxval=stdv
    )

    out = graph_convolution(x, adj, weight, bias)
    out = jax.block_until_ready(out)
    assert out.shape == (B, N, out_features)

    # Tight check against exact math on the bf16-rounded operands the kernel consumes
    # (the kernel accumulates in f32, so only summation-order noise remains).
    xb = x.astype(jnp.bfloat16).astype(jnp.float32)
    ab = adj.astype(jnp.bfloat16).astype(jnp.float32)
    wb = weight.astype(jnp.bfloat16).astype(jnp.float32)
    ref_bf16 = jnp.einsum("bnm,bmi->bni", ab, xb) @ wb + bias
    assert jnp.allclose(out, ref_bf16, atol=1e-3, rtol=1e-3), "mismatch vs bf16-input ref"

    # Loose check against the full-f32 module semantics (bf16 operand rounding).
    ref_f32 = (
        jnp.einsum("bnm,bmf->bnf", adj, jnp.einsum("bni,io->bno", x, weight)) + bias
    )
    assert jnp.allclose(out, ref_f32, atol=2e-1, rtol=5e-2), "mismatch vs f32 ref"

    print("KERNEL_OK")
</pallas_src>

<mosaic_0001>
module attributes {stable_mosaic.version = 11 : i64} {
  func.func @_gcn_kernel_aggregate_then_project(%arg0: i32, %arg1: i32, %arg2: i32, %arg3: memref<2x128x128xbf16, #tpu.memory_space<vmem>>, %arg4: memref<2x128x128xbf16, #tpu.memory_space<vmem>>, %arg5: memref<128x128xbf16, #tpu.memory_space<vmem>>, %arg6: memref<1x128xf32, #tpu.memory_space<vmem>>, %arg7: memref<2x128x128xf32, #tpu.memory_space<vmem>>, %arg8: memref<2x128x128xf32, #tpu.memory_space<vmem>>) attributes {dimension_semantics = [#tpu.dimension_semantics<parallel>, #tpu.dimension_semantics<parallel>, #tpu.dimension_semantics<arbitrary>], iteration_bounds = array<i64: 1, 1, 1>, scalar_prefetch = 0 : i64, scratch_operands = 1 : i64, tpu.core_type = #tpu.core_type<tc>, window_params = [{transform_indices = @transform_0, window_bounds = array<i64: 2, 128, 128>}, {transform_indices = @transform_1, window_bounds = array<i64: 2, 128, 128>}, {pipeline_mode = #tpu.pipeline_mode<synchronous>, transform_indices = @transform_2, window_bounds = array<i64: 128, 128>}, {pipeline_mode = #tpu.pipeline_mode<synchronous>, transform_indices = @transform_3, window_bounds = array<i64: 1, 128>}, {transform_indices = @transform_4, window_bounds = array<i64: 2, 128, 128>}]} {
    %c0_i32 = arith.constant 0 : i32
    %0 = arith.cmpi eq, %arg2, %c0_i32 : i32
    %1 = arith.extui %0 : i1 to i32
    %c0_i32_0 = arith.constant 0 : i32
    %2 = arith.cmpi ne, %1, %c0_i32_0 : i32
    scf.if %2 {
      %cst_26 = arith.constant 0.000000e+00 : f32
      %28 = vector.broadcast %cst_26 : f32 to vector<2x128x128xf32>
      %c0_27 = arith.constant 0 : index
      %c0_28 = arith.constant 0 : index
      %c0_29 = arith.constant 0 : index
      %29 = vector.load %arg8[%c0_27, %c0_28, %c0_29] : memref<2x128x128xf32, #tpu.memory_space<vmem>>, vector<2x128x128xf32>
      tpu.vector_store %arg8[%c0_27, %c0_28, %c0_29], %28 {strides = array<i32>} : memref<2x128x128xf32, #tpu.memory_space<vmem>>, vector<2x128x128xf32>,
    } else {
    }
    %c0 = arith.constant 0 : index
    %c0_1 = arith.constant 0 : index
    %c0_2 = arith.constant 0 : index
    %3 = vector.load %arg8[%c0, %c0_1, %c0_2] : memref<2x128x128xf32, #tpu.memory_space<vmem>>, vector<1x128x128xf32>
    %4 = vector.shape_cast %3 : vector<1x128x128xf32> to vector<128x128xf32>
    %c0_3 = arith.constant 0 : index
    %c0_4 = arith.constant 0 : index
    %c0_5 = arith.constant 0 : index
    %5 = vector.load %arg3[%c0_3, %c0_4, %c0_5] : memref<2x128x128xbf16, #tpu.memory_space<vmem>>, vector<1x128x128xbf16>
    %6 = vector.shape_cast %5 : vector<1x128x128xbf16> to vector<128x128xbf16>
    %c0_6 = arith.constant 0 : index
    %c0_7 = arith.constant 0 : index
    %c0_8 = arith.constant 0 : index
    %7 = vector.load %arg4[%c0_6, %c0_7, %c0_8] : memref<2x128x128xbf16, #tpu.memory_space<vmem>>, vector<1x128x128xbf16>
    %8 = vector.shape_cast %7 : vector<1x128x128xbf16> to vector<128x128xbf16>
    %cst = arith.constant dense<0.000000e+00> : vector<128x128xf32>
    %9 = tpu.matmul %6, %8, %cst {dimension_numbers = #tpu.dot_dimension_numbers<[1], [0], [0], [1], [0, 0, 1, 1], [], []>} : vector<128x128xbf16>, vector<128x128xbf16>, vector<128x128xf32> -> vector<128x128xf32>
    %10 = arith.addf %4, %9 : vector<128x128xf32>
    %c0_9 = arith.constant 0 : index
    %c0_10 = arith.constant 0 : index
    %c0_11 = arith.constant 0 : index
    %11 = vector.load %arg8[%c0_9, %c0_10, %c0_11] : memref<2x128x128xf32, #tpu.memory_space<vmem>>, vector<1x128x128xf32>
    %12 = vector.shape_cast %11 : vector<1x128x128xf32> to vector<128x128xf32>
    %13 = vector.shape_cast %10 : vector<128x128xf32> to vector<1x128x128xf32>
    tpu.vector_store %arg8[%c0_9, %c0_10, %c0_11], %13 {strides = array<i32>} : memref<2x128x128xf32, #tpu.memory_space<vmem>>, vector<1x128x128xf32>,
    %c1 = arith.constant 1 : index
    %c0_12 = arith.constant 0 : index
    %c0_13 = arith.constant 0 : index
    %14 = vector.load %arg8[%c1, %c0_12, %c0_13] : memref<2x128x128xf32, #tpu.memory_space<vmem>>, vector<1x128x128xf32>
    %15 = vector.shape_cast %14 : vector<1x128x128xf32> to vector<128x128xf32>
    %c1_14 = arith.constant 1 : index
    %c0_15 = arith.constant 0 : index
    %c0_16 = arith.constant 0 : index
    %16 = vector.load %arg3[%c1_14, %c0_15, %c0_16] : memref<2x128x128xbf16, #tpu.memory_space<vmem>>, vector<1x128x128xbf16>
    %17 = vector.shape_cast %16 : vector<1x128x128xbf16> to vector<128x128xbf16>
    %c1_17 = arith.constant 1 : index
    %c0_18 = arith.constant 0 : index
    %c0_19 = arith.constant 0 : index
    %18 = vector.load %arg4[%c1_17, %c0_18, %c0_19] : memref<2x128x128xbf16, #tpu.memory_space<vmem>>, vector<1x128x128xbf16>
    %19 = vector.shape_cast %18 : vector<1x128x128xbf16> to vector<128x128xbf16>
    %cst_20 = arith.constant dense<0.000000e+00> : vector<128x128xf32>
    %20 = tpu.matmul %17, %19, %cst_20 {dimension_numbers = #tpu.dot_dimension_numbers<[1], [0], [0], [1], [0, 0, 1, 1], [], []>} : vector<128x128xbf16>, vector<128x128xbf16>, vector<128x128xf32> -> vector<128x128xf32>
    %21 = arith.addf %15, %20 : vector<128x128xf32>
    %c1_21 = arith.constant 1 : index
    %c0_22 = arith.constant 0 : index
    %c0_23 = arith.constant 0 : index
    %22 = vector.load %arg8[%c1_21, %c0_22, %c0_23] : memref<2x128x128xf32, #tpu.memory_space<vmem>>, vector<1x128x128xf32>
    %23 = vector.shape_cast %22 : vector<1x128x128xf32> to vector<128x128xf32>
    %24 = vector.shape_cast %21 : vector<128x128xf32> to vector<1x128x128xf32>
    tpu.vector_store %arg8[%c1_21, %c0_22, %c0_23], %24 {strides = array<i32>} : memref<2x128x128xf32, #tpu.memory_space<vmem>>, vector<1x128x128xf32>,
    %c0_i32_24 = arith.constant 0 : i32
    %25 = arith.cmpi eq, %arg2, %c0_i32_24 : i32
    %26 = arith.extui %25 : i1 to i32
    %c0_i32_25 = arith.constant 0 : i32
    %27 = arith.cmpi ne, %26, %c0_i32_25 : i32
    scf.if %27 {
      %c0_26 = arith.constant 0 : index
      %c0_27 = arith.constant 0 : index
      %28 = vector.load %arg5[%c0_26, %c0_27] : memref<128x128xbf16, #tpu.memory_space<vmem>>, vector<128x128xbf16>
      %29 = arith.extf %28 : vector<128x128xbf16> to vector<128x128xf32>
      %c0_28 = arith.constant 0 : index
      %c0_29 = arith.constant 0 : index
      %30 = vector.load %arg6[%c0_28, %c0_29] : memref<1x128xf32, #tpu.memory_space<vmem>>, vector<1x128xf32>
      %c0_30 = arith.constant 0 : index
      %c0_31 = arith.constant 0 : index
      %c0_32 = arith.constant 0 : index
      %31 = vector.load %arg8[%c0_30, %c0_31, %c0_32] : memref<2x128x128xf32, #tpu.memory_space<vmem>>, vector<1x128x128xf32>
      %32 = vector.shape_cast %31 : vector<1x128x128xf32> to vector<128x128xf32>
      %cst_33 = arith.constant dense<0.000000e+00> : vector<128x128xf32>
      %33 = tpu.matmul %32, %29, %cst_33 {dimension_numbers = #tpu.dot_dimension_numbers<[1], [0], [0], [1], [0, 0, 1, 1], [], []>} : vector<128x128xf32>, vector<128x128xf32>, vector<128x128xf32> -> vector<128x128xf32>
      %34 = vector.broadcast %30 : vector<1x128xf32> to vector<128x128xf32>
      %35 = arith.addf %33, %34 : vector<128x128xf32>
      %c0_34 = arith.constant 0 : index
      %c0_35 = arith.constant 0 : index
      %c0_36 = arith.constant 0 : index
      %36 = vector.load %arg7[%c0_34, %c0_35, %c0_36] : memref<2x128x128xf32, #tpu.memory_space<vmem>>, vector<1x128x128xf32>
      %37 = vector.shape_cast %36 : vector<1x128x128xf32> to vector<128x128xf32>
      %38 = vector.shape_cast %35 : vector<128x128xf32> to vector<1x128x128xf32>
      tpu.vector_store %arg7[%c0_34, %c0_35, %c0_36], %38 {strides = array<i32>} : memref<2x128x128xf32, #tpu.memory_space<vmem>>, vector<1x128x128xf32>,
      %c1_37 = arith.constant 1 : index
      %c0_38 = arith.constant 0 : index
      %c0_39 = arith.constant 0 : index
      %39 = vector.load %arg8[%c1_37, %c0_38, %c0_39] : memref<2x128x128xf32, #tpu.memory_space<vmem>>, vector<1x128x128xf32>
      %40 = vector.shape_cast %39 : vector<1x128x128xf32> to vector<128x128xf32>
      %cst_40 = arith.constant dense<0.000000e+00> : vector<128x128xf32>
      %41 = tpu.matmul %40, %29, %cst_40 {dimension_numbers = #tpu.dot_dimension_numbers<[1], [0], [0], [1], [0, 0, 1, 1], [], []>} : vector<128x128xf32>, vector<128x128xf32>, vector<128x128xf32> -> vector<128x128xf32>
      %42 = vector.broadcast %30 : vector<1x128xf32> to vector<128x128xf32>
      %43 = arith.addf %41, %42 : vector<128x128xf32>
      %c1_41 = arith.constant 1 : index
      %c0_42 = arith.constant 0 : index
      %c0_43 = arith.constant 0 : index
      %44 = vector.load %arg7[%c1_41, %c0_42, %c0_43] : memref<2x128x128xf32, #tpu.memory_space<vmem>>, vector<1x128x128xf32>
      %45 = vector.shape_cast %44 : vector<1x128x128xf32> to vector<128x128xf32>
      %46 = vector.shape_cast %43 : vector<128x128xf32> to vector<1x128x128xf32>
      tpu.vector_store %arg7[%c1_41, %c0_42, %c0_43], %46 {strides = array<i32>} : memref<2x128x128xf32, #tpu.memory_space<vmem>>, vector<1x128x128xf32>,
    } else {
    }
    return
  }
  func.func @transform_0(%arg0: i32, %arg1: i32, %arg2: i32) -> (i32, i32, i32) {
    %c0_i32 = arith.constant 0 : i32
    return %arg0, %arg1, %arg2 : i32, i32, i32
  }
  func.func @transform_1(%arg0: i32, %arg1: i32, %arg2: i32) -> (i32, i32, i32) {
    %c0_i32 = arith.constant 0 : i32
    %c0_i32_0 = arith.constant 0 : i32
    return %arg0, %arg2, %c0_i32 : i32, i32, i32
  }
  func.func @transform_2(%arg0: i32, %arg1: i32, %arg2: i32) -> (i32, i32) {
    %c0_i32 = arith.constant 0 : i32
    %c0_i32_0 = arith.constant 0 : i32
    %c0_i32_1 = arith.constant 0 : i32
    return %c0_i32, %c0_i32_0 : i32, i32
  }
  func.func @transform_3(%arg0: i32, %arg1: i32, %arg2: i32) -> (i32, i32) {
    %c0_i32 = arith.constant 0 : i32
    %c0_i32_0 = arith.constant 0 : i32
    %c0_i32_1 = arith.constant 0 : i32
    return %c0_i32, %c0_i32_0 : i32, i32
  }
  func.func @transform_4(%arg0: i32, %arg1: i32, %arg2: i32) -> (i32, i32, i32) {
    %c0_i32 = arith.constant 0 : i32
    %c0_i32_0 = arith.constant 0 : i32
    return %arg0, %arg1, %c0_i32 : i32, i32, i32
  }
}

</mosaic_0001>

<llo_original>
// kernel: tpu_custom_call.1
$region0: #{tpu_custom_call.1}
  #allocation0 [shape = 'u32[]', space=smem, size = 0x4, offset = 0x4, fixed_abs, tag = 'smem constant byte address 0x4 - core index']
  #allocation1 [shape = 'u32[72,128]{1,0:T(1,128)}', space=vmem, size = 0x9000, scoped, tag = 'internal scratch']
  #allocation2 [shape = 'f32[2,128,128]{2,1,0:T(8,128)}', space=vmem, size = 0x20000, scoped, tag = 'scratch operand']
  %s0 = inlined_call_operand.hbm [shape: bf16[2,128,128], index: 0, kind: input, shape index: {}]
  %s1 = inlined_call_operand.hbm [shape: bf16[2,128,128], index: 1, kind: input, shape index: {}]
  %s2 = inlined_call_operand.hbm [shape: bf16[128,128], index: 2, kind: input, shape index: {}]
  %s3 = inlined_call_operand.vmem [shape: f32[1,128], index: 3, kind: input, shape index: {}]
  %s4 = inlined_call_operand.hbm [shape: f32[2,128,128], index: 4, kind: output, shape index: {}]
  %s5 = sld [smem:[#allocation0]]
  $region46: #{tpu_custom_call.1} parent=0
    _
  %s7 = ssub.s32 1, %s5
  %s8 = scalar_select 0, %s7, %s5
  $region1: #{tpu_custom_call.1} parent=0
    #allocation3 [shape = 'u8[65536]{0}', space=vmem, size = 0x10000, scoped, tag = 'input window, operand 0, single buffered']
    #allocation4 [shape = 's32[1]{0}', space=sflag, size = 0x4, scoped, tag = 'scoped memory for tpu_custom_call.1']
    #allocation5 [shape = 's32[1]{0}', space=sflag, size = 0x4, scoped, tag = 'scoped memory for tpu_custom_call.1']
    #allocation6 [shape = 'u8[65536]{0}', space=vmem, size = 0x10000, scoped, tag = 'input window, operand 1, single buffered']
    #allocation7 [shape = 's32[1]{0}', space=sflag, size = 0x4, scoped, tag = 'scoped memory for tpu_custom_call.1']
    #allocation8 [shape = 'u8[32768]{0}', space=vmem, size = 0x8000, scoped, tag = 'input window, operand 2, single buffered']
    #allocation9 [shape = 'u8[131072]{0}', space=vmem, size = 0x20000, scoped, tag = 'output window, operand 0, single buffered']
    %9 = vsyncpa [#allocation4], 0
    %10 = vsyncpa [#allocation7], 0
    %11 = vsyncpa [#allocation5], 0
    // Predicated region
    $region2: #{tpu_custom_call.1} parent=1 // pred_check
      _
    $region3: #{tpu_custom_call.1} parent=1 // pred_check_branch
      %13 = sbr.rel (0) target = $region5
    $region4: #{tpu_custom_call.1} parent=1 // pred_region
      %15 = vsyncadd [#allocation4], 0
      %s16 = sshll.u32 %s0, 4
      %s17 = int_to_ptr.hbm [resolvable:$true] %s16
      %s18 = sshll.u32 [#allocation3], 4
      %s19 = int_to_ptr.vmem [resolvable:$true] %s18
      %24 = dma.hbm_to_vmem [thread:$0]  %s17, 2048, %s19, [#allocation4], 64, 64, 4
    $region5: #{tpu_custom_call.1} parent=1 // pred_fallthru
      _
    // Predicated region
    $region6: #{tpu_custom_call.1} parent=1 // pred_check
      _
    $region7: #{tpu_custom_call.1} parent=1 // pred_check_branch
      %26 = sbr.rel (0) target = $region9
    $region8: #{tpu_custom_call.1} parent=1 // pred_region
      %28 = vsyncadd [#allocation7], 0
      %s29 = sshll.u32 %s1, 4
      %s30 = int_to_ptr.hbm [resolvable:$true] %s29
      %s31 = sshll.u32 [#allocation6], 4
      %s32 = int_to_ptr.vmem [resolvable:$true] %s31
      %37 = dma.hbm_to_vmem [thread:$0]  %s30, 2048, %s32, [#allocation7], 64, 64, 4
    $region9: #{tpu_custom_call.1} parent=1 // pred_fallthru
      _
    // Predicated region
    $region10: #{tpu_custom_call.1} parent=1 // pred_check
      _
    $region11: #{tpu_custom_call.1} parent=1 // pred_check_branch
      %39 = sbr.rel (0) target = $region13
    $region12: #{tpu_custom_call.1} parent=1 // pred_region
      %41 = vsyncadd [#allocation7], 0
      %s42 = sshll.u32 %s2, 4
      %s43 = int_to_ptr.hbm [resolvable:$true] %s42
      %s44 = sshll.u32 [#allocation8], 4
      %s45 = int_to_ptr.vmem [resolvable:$true] %s44
      %50 = dma.hbm_to_vmem [thread:$0]  %s43, 1024, %s45, [#allocation7], 64, 64, 4
    $region13: #{tpu_custom_call.1} parent=1 // pred_fallthru
      _
    // Predicated region
    $region14: #{tpu_custom_call.1} parent=1 // pred_check
      _
    $region15: #{tpu_custom_call.1} parent=1 // pred_check_branch
      %52 = sbr.rel (0) target = $region17
    $region16: #{tpu_custom_call.1} parent=1 // pred_region
      _
    $region17: #{tpu_custom_call.1} parent=1 // pred_fallthru
      _
    // Predicated region
    $region18: #{tpu_custom_call.1} parent=1 // pred_check
      _
    $region19: #{tpu_custom_call.1} parent=1 // pred_check_branch
      %54 = sbr.rel (0) target = $region21
    $region20: #{tpu_custom_call.1} parent=1 // pred_region
      %56 = dma.done [#allocation4], 2048
    $region21: #{tpu_custom_call.1} parent=1 // pred_fallthru
      _
    // Predicated region
    $region22: #{tpu_custom_call.1} parent=1 // pred_check
      _
    $region23: #{tpu_custom_call.1} parent=1 // pred_check_branch
      %58 = sbr.rel (0) target = $region25
    $region24: #{tpu_custom_call.1} parent=1 // pred_region
      %60 = dma.done [#allocation7], 2048
    $region25: #{tpu_custom_call.1} parent=1 // pred_fallthru
      _
    // Predicated region
    $region26: #{tpu_custom_call.1} parent=1 // pred_check
      _
    $region27: #{tpu_custom_call.1} parent=1 // pred_check_branch
      %62 = sbr.rel (0) target = $region29
    $region28: #{tpu_custom_call.1} parent=1 // pred_region
      %64 = dma.done [#allocation7], 1024
    $region29: #{tpu_custom_call.1} parent=1 // pred_fallthru
      _
    %p65 = scmp.eq.s32.totalorder 0, 0
    // Predicated region
    $region30: #{tpu_custom_call.1} parent=1 // pred_check
      %p66 = pneg %p65
    $region31: #{tpu_custom_call.1} parent=1 // pred_check_branch
      %68 = sbr.rel (%p66) target = $region33
    $region32: #{tpu_custom_call.1} parent=1 // pred_region
      %69 = vst [vmem:[#allocation2] sm:$0xff] 0.0
      %70 = vst [vmem:[#allocation2 + $0x8] sm:$0xff] 0.0
      %71 = vst [vmem:[#allocation2 + $0x10] sm:$0xff] 0.0
      %72 = vst [vmem:[#allocation2 + $0x18] sm:$0xff] 0.0
      %73 = vst [vmem:[#allocation2 + $0x20] sm:$0xff] 0.0
      %74 = vst [vmem:[#allocation2 + $0x28] sm:$0xff] 0.0
      %75 = vst [vmem:[#allocation2 + $0x30] sm:$0xff] 0.0
      %76 = vst [vmem:[#allocation2 + $0x38] sm:$0xff] 0.0
      %77 = vst [vmem:[#allocation2 + $0x40] sm:$0xff] 0.0
      %78 = vst [vmem:[#allocation2 + $0x48] sm:$0xff] 0.0
      %79 = vst [vmem:[#allocation2 + $0x50] sm:$0xff] 0.0
      %80 = vst [vmem:[#allocation2 + $0x58] sm:$0xff] 0.0
      %81 = vst [vmem:[#allocation2 + $0x60] sm:$0xff] 0.0
      %82 = vst [vmem:[#allocation2 + $0x68] sm:$0xff] 0.0
      %83 = vst [vmem:[#allocation2 + $0x70] sm:$0xff] 0.0
      %84 = vst [vmem:[#allocation2 + $0x78] sm:$0xff] 0.0
      %85 = vst [vmem:[#allocation2 + $0x80] sm:$0xff] 0.0
      %86 = vst [vmem:[#allocation2 + $0x88] sm:$0xff] 0.0
      %87 = vst [vmem:[#allocation2 + $0x90] sm:$0xff] 0.0
      %88 = vst [vmem:[#allocation2 + $0x98] sm:$0xff] 0.0
      %89 = vst [vmem:[#allocation2 + $0xa0] sm:$0xff] 0.0
      %90 = vst [vmem:[#allocation2 + $0xa8] sm:$0xff] 0.0
      %91 = vst [vmem:[#allocation2 + $0xb0] sm:$0xff] 0.0
      %92 = vst [vmem:[#allocation2 + $0xb8] sm:$0xff] 0.0
      %93 = vst [vmem:[#allocation2 + $0xc0] sm:$0xff] 0.0
      %94 = vst [vmem:[#allocation2 + $0xc8] sm:$0xff] 0.0
      %95 = vst [vmem:[#allocation2 + $0xd0] sm:$0xff] 0.0
      %96 = vst [vmem:[#allocation2 + $0xd8] sm:$0xff] 0.0
      %97 = vst [vmem:[#allocation2 + $0xe0] sm:$0xff] 0.0
      %98 = vst [vmem:[#allocation2 + $0xe8] sm:$0xff] 0.0
      %99 = vst [vmem:[#allocation2 + $0xf0] sm:$0xff] 0.0
      %100 = vst [vmem:[#allocation2 + $0xf8] sm:$0xff] 0.0
    $region33: #{tpu_custom_call.1} parent=1 // pred_fallthru
      _
    %v101 = vld [vmem:[#allocation2] sm:$0xff]
    %v102 = vld [vmem:[#allocation2 + $0x8] sm:$0xff]
    %v103 = vld [vmem:[#allocation2 + $0x10] sm:$0xff]
    %v104 = vld [vmem:[#allocation2 + $0x18] sm:$0xff]
    %v105 = vld [vmem:[#allocation2 + $0x20] sm:$0xff]
    %v106 = vld [vmem:[#allocation2 + $0x28] sm:$0xff]
    %v107 = vld [vmem:[#allocation2 + $0x30] sm:$0xff]
    %v108 = vld [vmem:[#allocation2 + $0x38] sm:$0xff]
    %v109 = vld [vmem:[#allocation2 + $0x40] sm:$0xff]
    %v110 = vld [vmem:[#allocation2 + $0x48] sm:$0xff]
    %v111 = vld [vmem:[#allocation2 + $0x50] sm:$0xff]
    %v112 = vld [vmem:[#allocation2 + $0x58] sm:$0xff]
    %v113 = vld [vmem:[#allocation2 + $0x60] sm:$0xff]
    %v114 = vld [vmem:[#allocation2 + $0x68] sm:$0xff]
    %v115 = vld [vmem:[#allocation2 + $0x70] sm:$0xff]
    %v116 = vld [vmem:[#allocation2 + $0x78] sm:$0xff]
    %v117 = vld [vmem:[#allocation3] sm:$0xf]
    %v118 = vld [vmem:[#allocation3 + $0x4] sm:$0xf]
    %v119 = vld [vmem:[#allocation3 + $0x8] sm:$0xf]
    %v120 = vld [vmem:[#allocation3 + $0xc] sm:$0xf]
    %v121 = vld [vmem:[#allocation3 + $0x10] sm:$0xf]
    %v122 = vld [vmem:[#allocation3 + $0x14] sm:$0xf]
    %v123 = vld [vmem:[#allocation3 + $0x18] sm:$0xf]
    %v124 = vld [vmem:[#allocation3 + $0x1c] sm:$0xf]
    %v125 = vld [vmem:[#allocation3 + $0x20] sm:$0xf]
    %v126 = vld [vmem:[#allocation3 + $0x24] sm:$0xf]
    %v127 = vld [vmem:[#allocation3 + $0x28] sm:$0xf]
    %v128 = vld [vmem:[#allocation3 + $0x2c] sm:$0xf]
    %v129 = vld [vmem:[#allocation3 + $0x30] sm:$0xf]
    %v130 = vld [vmem:[#allocation3 + $0x34] sm:$0xf]
    %v131 = vld [vmem:[#allocation3 + $0x38] sm:$0xf]
    %v132 = vld [vmem:[#allocation3 + $0x3c] sm:$0xf]
    %v133 = vld [vmem:[#allocation6] sm:$0xf]
    %v134 = vld [vmem:[#allocation6 + $0x4] sm:$0xf]
    %v135 = vld [vmem:[#allocation6 + $0x8] sm:$0xf]
    %v136 = vld [vmem:[#allocation6 + $0xc] sm:$0xf]
    %v137 = vld [vmem:[#allocation6 + $0x10] sm:$0xf]
    %v138 = vld [vmem:[#allocation6 + $0x14] sm:$0xf]
    %v139 = vld [vmem:[#allocation6 + $0x18] sm:$0xf]
    %v140 = vld [vmem:[#allocation6 + $0x1c] sm:$0xf]
    %v141 = vld [vmem:[#allocation6 + $0x20] sm:$0xf]
    %v142 = vld [vmem:[#allocation6 + $0x24] sm:$0xf]
    %v143 = vld [vmem:[#allocation6 + $0x28] sm:$0xf]
    %v144 = vld [vmem:[#allocation6 + $0x2c] sm:$0xf]
    %v145 = vld [vmem:[#allocation6 + $0x30] sm:$0xf]
    %v146 = vld [vmem:[#allocation6 + $0x34] sm:$0xf]
    %v147 = vld [vmem:[#allocation6 + $0x38] sm:$0xf]
    %v148 = vld [vmem:[#allocation6 + $0x3c] sm:$0xf]
    %v165 = vunpack.c.l.b16 %v117
    %v166 = vunpack.c.l.b16 %v118
    %v167 = vunpack.c.l.b16 %v119
    %v168 = vunpack.c.l.b16 %v120
    %v169 = vunpack.c.l.b16 %v121
    %v170 = vunpack.c.l.b16 %v122
    %v171 = vunpack.c.l.b16 %v123
    %v172 = vunpack.c.l.b16 %v124
    %v173 = vunpack.c.l.b16 %v125
    %v174 = vunpack.c.l.b16 %v126
    %v175 = vunpack.c.l.b16 %v127
    %v176 = vunpack.c.l.b16 %v128
    %v177 = vunpack.c.l.b16 %v129
    %v178 = vunpack.c.l.b16 %v130
    %v179 = vunpack.c.l.b16 %v131
    %v180 = vunpack.c.l.b16 %v132
    %v181 = vpack.c.b16 %v166, %v165
    %v182 = vpack.c.b16 %v168, %v167
    %v183 = vpack.c.b16 %v170, %v169
    %v184 = vpack.c.b16 %v172, %v171
    %v185 = vpack.c.b16 %v174, %v173
    %v186 = vpack.c.b16 %v176, %v175
    %v187 = vpack.c.b16 %v178, %v177
    %v188 = vpack.c.b16 %v180, %v179
    %v213 = vunpack.c.l.b16 %v133
    %v214 = vunpack.c.l.b16 %v134
    %v215 = vunpack.c.l.b16 %v135
    %v216 = vunpack.c.l.b16 %v136
    %v217 = vunpack.c.l.b16 %v137
    %v218 = vunpack.c.l.b16 %v138
    %v219 = vunpack.c.l.b16 %v139
    %v220 = vunpack.c.l.b16 %v140
    %v221 = vunpack.c.l.b16 %v141
    %v222 = vunpack.c.l.b16 %v142
    %v223 = vunpack.c.l.b16 %v143
    %v224 = vunpack.c.l.b16 %v144
    %v225 = vunpack.c.l.b16 %v145
    %v226 = vunpack.c.l.b16 %v146
    %v227 = vunpack.c.l.b16 %v147
    %v228 = vunpack.c.l.b16 %v148
    %v229 = vpack.c.b16 %v214, %v213
    %v230 = vpack.c.b16 %v216, %v215
    %v231 = vpack.c.b16 %v218, %v217
    %v232 = vpack.c.b16 %v220, %v219
    %v233 = vpack.c.b16 %v222, %v221
    %v234 = vpack.c.b16 %v224, %v223
    %v235 = vpack.c.b16 %v226, %v225
    %v236 = vpack.c.b16 %v228, %v227
    %245 = vmatpush.bf16.msra.mxu0 %v236
    %246 = vmatpush.bf16.msra.mxu0 %v235
    %247 = vmatpush.bf16.msra.mxu0 %v234
    %248 = vmatpush.bf16.msra.mxu0 %v233
    %249 = vmatpush.bf16.msra.mxu0 %v232
    %250 = vmatpush.bf16.msra.mxu0 %v231
    %251 = vmatpush.bf16.msra.mxu0 %v230
    %252 = vmatpush.bf16.msra.mxu0 %v229
    %253 = vmatmul.bf16.gmra.mxu0 %v181
    %v254 = vpop.f32.mrf.mxu0
    %v255 = vadd.f32 0.0, %v254
    %v256 = vpop.f32.mrf.mxu0
    %v257 = vadd.f32 0.0, %v256
    %258 = vmatmul.bf16.gmra.mxu0 %v182
    %v259 = vpop.f32.mrf.mxu0
    %v260 = vadd.f32 0.0, %v259
    %v261 = vpop.f32.mrf.mxu0
    %v262 = vadd.f32 0.0, %v261
    %263 = vmatmul.bf16.gmra.mxu0 %v183
    %v264 = vpop.f32.mrf.mxu0
    %v265 = vadd.f32 0.0, %v264
    %v266 = vpop.f32.mrf.mxu0
    %v267 = vadd.f32 0.0, %v266
    %268 = vmatmul.bf16.gmra.mxu0 %v184
    %v269 = vpop.f32.mrf.mxu0
    %v270 = vadd.f32 0.0, %v269
    %v271 = vpop.f32.mrf.mxu0
    %v272 = vadd.f32 0.0, %v271
    %273 = vmatmul.bf16.gmra.mxu0 %v185
    %v274 = vpop.f32.mrf.mxu0
    %v275 = vadd.f32 0.0, %v274
    %v276 = vpop.f32.mrf.mxu0
    %v277 = vadd.f32 0.0, %v276
    %278 = vmatmul.bf16.gmra.mxu0 %v186
    %v279 = vpop.f32.mrf.mxu0
    %v280 = vadd.f32 0.0, %v279
    %v281 = vpop.f32.mrf.mxu0
    %v282 = vadd.f32 0.0, %v281
    %283 = vmatmul.bf16.gmra.mxu0 %v187
    %v284 = vpop.f32.mrf.mxu0
    %v285 = vadd.f32 0.0, %v284
    %v286 = vpop.f32.mrf.mxu0
    %v287 = vadd.f32 0.0, %v286
    %288 = vmatmul.bf16.gmra.mxu0 %v188
    %v289 = vpop.f32.mrf.mxu0
    %v290 = vadd.f32 0.0, %v289
    %v291 = vpop.f32.mrf.mxu0
    %v292 = vadd.f32 0.0, %v291
    %293 = vdwg.mxu0
    %v294 = vadd.f32 %v101, %v255
    %v295 = vadd.f32 %v102, %v257
    %v296 = vadd.f32 %v103, %v260
    %v297 = vadd.f32 %v104, %v262
    %v298 = vadd.f32 %v105, %v265
    %v299 = vadd.f32 %v106, %v267
    %v300 = vadd.f32 %v107, %v270
    %v301 = vadd.f32 %v108, %v272
    %v302 = vadd.f32 %v109, %v275
    %v303 = vadd.f32 %v110, %v277
    %v304 = vadd.f32 %v111, %v280
    %v305 = vadd.f32 %v112, %v282
    %v306 = vadd.f32 %v113, %v285
    %v307 = vadd.f32 %v114, %v287
    %v308 = vadd.f32 %v115, %v290
    %v309 = vadd.f32 %v116, %v292
    %310 = vst [vmem:[#allocation2] sm:$0xff] %v294
    %311 = vst [vmem:[#allocation2 + $0x8] sm:$0xff] %v295
    %312 = vst [vmem:[#allocation2 + $0x10] sm:$0xff] %v296
    %313 = vst [vmem:[#allocation2 + $0x18] sm:$0xff] %v297
    %314 = vst [vmem:[#allocation2 + $0x20] sm:$0xff] %v298
    %315 = vst [vmem:[#allocation2 + $0x28] sm:$0xff] %v299
    %316 = vst [vmem:[#allocation2 + $0x30] sm:$0xff] %v300
    %317 = vst [vmem:[#allocation2 + $0x38] sm:$0xff] %v301
    %318 = vst [vmem:[#allocation2 + $0x40] sm:$0xff] %v302
    %319 = vst [vmem:[#allocation2 + $0x48] sm:$0xff] %v303
    %320 = vst [vmem:[#allocation2 + $0x50] sm:$0xff] %v304
    %321 = vst [vmem:[#allocation2 + $0x58] sm:$0xff] %v305
    %322 = vst [vmem:[#allocation2 + $0x60] sm:$0xff] %v306
    %323 = vst [vmem:[#allocation2 + $0x68] sm:$0xff] %v307
    %324 = vst [vmem:[#allocation2 + $0x70] sm:$0xff] %v308
    %325 = vst [vmem:[#allocation2 + $0x78] sm:$0xff] %v309
    %s326 = scalar_lea.vmem [#allocation2], 128
    %v327 = vld [vmem:[%s326] sm:$0xff]
    %v328 = vld [vmem:[%s326 + $0x8] sm:$0xff]
    %v329 = vld [vmem:[%s326 + $0x10] sm:$0xff]
    %v330 = vld [vmem:[%s326 + $0x18] sm:$0xff]
    %v331 = vld [vmem:[%s326 + $0x20] sm:$0xff]
    %v332 = vld [vmem:[%s326 + $0x28] sm:$0xff]
    %v333 = vld [vmem:[%s326 + $0x30] sm:$0xff]
    %v334 = vld [vmem:[%s326 + $0x38] sm:$0xff]
    %v335 = vld [vmem:[%s326 + $0x40] sm:$0xff]
    %v336 = vld [vmem:[%s326 + $0x48] sm:$0xff]
    %v337 = vld [vmem:[%s326 + $0x50] sm:$0xff]
    %v338 = vld [vmem:[%s326 + $0x58] sm:$0xff]
    %v339 = vld [vmem:[%s326 + $0x60] sm:$0xff]
    %v340 = vld [vmem:[%s326 + $0x68] sm:$0xff]
    %v341 = vld [vmem:[%s326 + $0x70] sm:$0xff]
    %v342 = vld [vmem:[%s326 + $0x78] sm:$0xff]
    %s343 = scalar_lea.vmem [#allocation3], 64
    %v344 = vld [vmem:[%s343] sm:$0xf]
    %v345 = vld [vmem:[%s343 + $0x4] sm:$0xf]
    %v346 = vld [vmem:[%s343 + $0x8] sm:$0xf]
    %v347 = vld [vmem:[%s343 + $0xc] sm:$0xf]
    %v348 = vld [vmem:[%s343 + $0x10] sm:$0xf]
    %v349 = vld [vmem:[%s343 + $0x14] sm:$0xf]
    %v350 = vld [vmem:[%s343 + $0x18] sm:$0xf]
    %v351 = vld [vmem:[%s343 + $0x1c] sm:$0xf]
    %v352 = vld [vmem:[%s343 + $0x20] sm:$0xf]
    %v353 = vld [vmem:[%s343 + $0x24] sm:$0xf]
    %v354 = vld [vmem:[%s343 + $0x28] sm:$0xf]
    %v355 = vld [vmem:[%s343 + $0x2c] sm:$0xf]
    %v356 = vld [vmem:[%s343 + $0x30] sm:$0xf]
    %v357 = vld [vmem:[%s343 + $0x34] sm:$0xf]
    %v358 = vld [vmem:[%s343 + $0x38] sm:$0xf]
    %v359 = vld [vmem:[%s343 + $0x3c] sm:$0xf]
    %s360 = scalar_lea.vmem [#allocation6], 64
    %v361 = vld [vmem:[%s360] sm:$0xf]
    %v362 = vld [vmem:[%s360 + $0x4] sm:$0xf]
    %v363 = vld [vmem:[%s360 + $0x8] sm:$0xf]
    %v364 = vld [vmem:[%s360 + $0xc] sm:$0xf]
    %v365 = vld [vmem:[%s360 + $0x10] sm:$0xf]
    %v366 = vld [vmem:[%s360 + $0x14] sm:$0xf]
    %v367 = vld [vmem:[%s360 + $0x18] sm:$0xf]
    %v368 = vld [vmem:[%s360 + $0x1c] sm:$0xf]
    %v369 = vld [vmem:[%s360 + $0x20] sm:$0xf]
    %v370 = vld [vmem:[%s360 + $0x24] sm:$0xf]
    %v371 = vld [vmem:[%s360 + $0x28] sm:$0xf]
    %v372 = vld [vmem:[%s360 + $0x2c] sm:$0xf]
    %v373 = vld [vmem:[%s360 + $0x30] sm:$0xf]
    %v374 = vld [vmem:[%s360 + $0x34] sm:$0xf]
    %v375 = vld [vmem:[%s360 + $0x38] sm:$0xf]
    %v376 = vld [vmem:[%s360 + $0x3c] sm:$0xf]
    %v393 = vunpack.c.l.b16 %v344
    %v394 = vunpack.c.l.b16 %v345
    %v395 = vunpack.c.l.b16 %v346
    %v396 = vunpack.c.l.b16 %v347
    %v397 = vunpack.c.l.b16 %v348
    %v398 = vunpack.c.l.b16 %v349
    %v399 = vunpack.c.l.b16 %v350
    %v400 = vunpack.c.l.b16 %v351
    %v401 = vunpack.c.l.b16 %v352
    %v402 = vunpack.c.l.b16 %v353
    %v403 = vunpack.c.l.b16 %v354
    %v404 = vunpack.c.l.b16 %v355
    %v405 = vunpack.c.l.b16 %v356
    %v406 = vunpack.c.l.b16 %v357
    %v407 = vunpack.c.l.b16 %v358
    %v408 = vunpack.c.l.b16 %v359
    %v409 = vpack.c.b16 %v394, %v393
    %v410 = vpack.c.b16 %v396, %v395
    %v411 = vpack.c.b16 %v398, %v397
    %v412 = vpack.c.b16 %v400, %v399
    %v413 = vpack.c.b16 %v402, %v401
    %v414 = vpack.c.b16 %v404, %v403
    %v415 = vpack.c.b16 %v406, %v405
    %v416 = vpack.c.b16 %v408, %v407
    %v441 = vunpack.c.l.b16 %v361
    %v442 = vunpack.c.l.b16 %v362
    %v443 = vunpack.c.l.b16 %v363
    %v444 = vunpack.c.l.b16 %v364
    %v445 = vunpack.c.l.b16 %v365
    %v446 = vunpack.c.l.b16 %v366
    %v447 = vunpack.c.l.b16 %v367
    %v448 = vunpack.c.l.b16 %v368
    %v449 = vunpack.c.l.b16 %v369
    %v450 = vunpack.c.l.b16 %v370
    %v451 = vunpack.c.l.b16 %v371
    %v452 = vunpack.c.l.b16 %v372
    %v453 = vunpack.c.l.b16 %v373
    %v454 = vunpack.c.l.b16 %v374
    %v455 = vunpack.c.l.b16 %v375
    %v456 = vunpack.c.l.b16 %v376
    %v457 = vpack.c.b16 %v442, %v441
    %v458 = vpack.c.b16 %v444, %v443
    %v459 = vpack.c.b16 %v446, %v445
    %v460 = vpack.c.b16 %v448, %v447
    %v461 = vpack.c.b16 %v450, %v449
    %v462 = vpack.c.b16 %v452, %v451
    %v463 = vpack.c.b16 %v454, %v453
    %v464 = vpack.c.b16 %v456, %v455
    %473 = vmatpush.bf16.msra.mxu0 %v464
    %474 = vmatpush.bf16.msra.mxu0 %v463
    %475 = vmatpush.bf16.msra.mxu0 %v462
    %476 = vmatpush.bf16.msra.mxu0 %v461
    %477 = vmatpush.bf16.msra.mxu0 %v460
    %478 = vmatpush.bf16.msra.mxu0 %v459
    %479 = vmatpush.bf16.msra.mxu0 %v458
    %480 = vmatpush.bf16.msra.mxu0 %v457
    %481 = vmatmul.bf16.gmra.mxu0 %v409
    %v482 = vpop.f32.mrf.mxu0
    %v483 = vadd.f32 0.0, %v482
    %v484 = vpop.f32.mrf.mxu0
    %v485 = vadd.f32 0.0, %v484
    %486 = vmatmul.bf16.gmra.mxu0 %v410
    %v487 = vpop.f32.mrf.mxu0
    %v488 = vadd.f32 0.0, %v487
    %v489 = vpop.f32.mrf.mxu0
    %v490 = vadd.f32 0.0, %v489
    %491 = vmatmul.bf16.gmra.mxu0 %v411
    %v492 = vpop.f32.mrf.mxu0
    %v493 = vadd.f32 0.0, %v492
    %v494 = vpop.f32.mrf.mxu0
    %v495 = vadd.f32 0.0, %v494
    %496 = vmatmul.bf16.gmra.mxu0 %v412
    %v497 = vpop.f32.mrf.mxu0
    %v498 = vadd.f32 0.0, %v497
    %v499 = vpop.f32.mrf.mxu0
    %v500 = vadd.f32 0.0, %v499
    %501 = vmatmul.bf16.gmra.mxu0 %v413
    %v502 = vpop.f32.mrf.mxu0
    %v503 = vadd.f32 0.0, %v502
    %v504 = vpop.f32.mrf.mxu0
    %v505 = vadd.f32 0.0, %v504
    %506 = vmatmul.bf16.gmra.mxu0 %v414
    %v507 = vpop.f32.mrf.mxu0
    %v508 = vadd.f32 0.0, %v507
    %v509 = vpop.f32.mrf.mxu0
    %v510 = vadd.f32 0.0, %v509
    %511 = vmatmul.bf16.gmra.mxu0 %v415
    %v512 = vpop.f32.mrf.mxu0
    %v513 = vadd.f32 0.0, %v512
    %v514 = vpop.f32.mrf.mxu0
    %v515 = vadd.f32 0.0, %v514
    %516 = vmatmul.bf16.gmra.mxu0 %v416
    %v517 = vpop.f32.mrf.mxu0
    %v518 = vadd.f32 0.0, %v517
    %v519 = vpop.f32.mrf.mxu0
    %v520 = vadd.f32 0.0, %v519
    %521 = vdwg.mxu0
    %v522 = vadd.f32 %v327, %v483
    %v523 = vadd.f32 %v328, %v485
    %v524 = vadd.f32 %v329, %v488
    %v525 = vadd.f32 %v330, %v490
    %v526 = vadd.f32 %v331, %v493
    %v527 = vadd.f32 %v332, %v495
    %v528 = vadd.f32 %v333, %v498
    %v529 = vadd.f32 %v334, %v500
    %v530 = vadd.f32 %v335, %v503
    %v531 = vadd.f32 %v336, %v505
    %v532 = vadd.f32 %v337, %v508
    %v533 = vadd.f32 %v338, %v510
    %v534 = vadd.f32 %v339, %v513
    %v535 = vadd.f32 %v340, %v515
    %v536 = vadd.f32 %v341, %v518
    %v537 = vadd.f32 %v342, %v520
    %538 = vst [vmem:[%s326] sm:$0xff] %v522
    %539 = vst [vmem:[%s326 + $0x8] sm:$0xff] %v523
    %540 = vst [vmem:[%s326 + $0x10] sm:$0xff] %v524
    %541 = vst [vmem:[%s326 + $0x18] sm:$0xff] %v525
    %542 = vst [vmem:[%s326 + $0x20] sm:$0xff] %v526
    %543 = vst [vmem:[%s326 + $0x28] sm:$0xff] %v527
    %544 = vst [vmem:[%s326 + $0x30] sm:$0xff] %v528
    %545 = vst [vmem:[%s326 + $0x38] sm:$0xff] %v529
    %546 = vst [vmem:[%s326 + $0x40] sm:$0xff] %v530
    %547 = vst [vmem:[%s326 + $0x48] sm:$0xff] %v531
    %548 = vst [vmem:[%s326 + $0x50] sm:$0xff] %v532
    %549 = vst [vmem:[%s326 + $0x58] sm:$0xff] %v533
    %550 = vst [vmem:[%s326 + $0x60] sm:$0xff] %v534
    %551 = vst [vmem:[%s326 + $0x68] sm:$0xff] %v535
    %552 = vst [vmem:[%s326 + $0x70] sm:$0xff] %v536
    %553 = vst [vmem:[%s326 + $0x78] sm:$0xff] %v537
    // Predicated region
    $region34: #{tpu_custom_call.1} parent=1 // pred_check
      %p554 = pneg %p65
    $region35: #{tpu_custom_call.1} parent=1 // pred_check_branch
      %556 = sbr.rel (%p554) target = $region37
    $region36: #{tpu_custom_call.1} parent=1 // pred_region
      %v557 = vld [vmem:[#allocation8] sm:$0xf]
      %v558 = vld [vmem:[#allocation8 + $0x4] sm:$0xf]
      %v559 = vld [vmem:[#allocation8 + $0x8] sm:$0xf]
      %v560 = vld [vmem:[#allocation8 + $0xc] sm:$0xf]
      %v561 = vld [vmem:[#allocation8 + $0x10] sm:$0xf]
      %v562 = vld [vmem:[#allocation8 + $0x14] sm:$0xf]
      %v563 = vld [vmem:[#allocation8 + $0x18] sm:$0xf]
      %v564 = vld [vmem:[#allocation8 + $0x1c] sm:$0xf]
      %v565 = vld [vmem:[#allocation8 + $0x20] sm:$0xf]
      %v566 = vld [vmem:[#allocation8 + $0x24] sm:$0xf]
      %v567 = vld [vmem:[#allocation8 + $0x28] sm:$0xf]
      %v568 = vld [vmem:[#allocation8 + $0x2c] sm:$0xf]
      %v569 = vld [vmem:[#allocation8 + $0x30] sm:$0xf]
      %v570 = vld [vmem:[#allocation8 + $0x34] sm:$0xf]
      %v571 = vld [vmem:[#allocation8 + $0x38] sm:$0xf]
      %v572 = vld [vmem:[#allocation8 + $0x3c] sm:$0xf]
      %v573 = vunpack.c.l.bf16 %v557
      %v574 = vunpack.c.l.bf16 %v558
      %v575 = vunpack.c.l.bf16 %v559
      %v576 = vunpack.c.l.bf16 %v560
      %v577 = vunpack.c.l.bf16 %v561
      %v578 = vunpack.c.l.bf16 %v562
      %v579 = vunpack.c.l.bf16 %v563
      %v580 = vunpack.c.l.bf16 %v564
      %v581 = vunpack.c.l.bf16 %v565
      %v582 = vunpack.c.l.bf16 %v566
      %v583 = vunpack.c.l.bf16 %v567
      %v584 = vunpack.c.l.bf16 %v568
      %v585 = vunpack.c.l.bf16 %v569
      %v586 = vunpack.c.l.bf16 %v570
      %v587 = vunpack.c.l.bf16 %v571
      %v588 = vunpack.c.l.bf16 %v572
      %v589 = vld [vmem:[%s3] sm:$0x1]
      %v590 = vld [vmem:[#allocation2] sm:$0xff]
      %v591 = vld [vmem:[#allocation2 + $0x8] sm:$0xff]
      %v592 = vld [vmem:[#allocation2 + $0x10] sm:$0xff]
      %v593 = vld [vmem:[#allocation2 + $0x18] sm:$0xff]
      %v594 = vld [vmem:[#allocation2 + $0x20] sm:$0xff]
      %v595 = vld [vmem:[#allocation2 + $0x28] sm:$0xff]
      %v596 = vld [vmem:[#allocation2 + $0x30] sm:$0xff]
      %v597 = vld [vmem:[#allocation2 + $0x38] sm:$0xff]
      %v598 = vld [vmem:[#allocation2 + $0x40] sm:$0xff]
      %v599 = vld [vmem:[#allocation2 + $0x48] sm:$0xff]
      %v600 = vld [vmem:[#allocation2 + $0x50] sm:$0xff]
      %v601 = vld [vmem:[#allocation2 + $0x58] sm:$0xff]
      %v602 = vld [vmem:[#allocation2 + $0x60] sm:$0xff]
      %v603 = vld [vmem:[#allocation2 + $0x68] sm:$0xff]
      %v604 = vld [vmem:[#allocation2 + $0x70] sm:$0xff]
      %v605 = vld [vmem:[#allocation2 + $0x78] sm:$0xff]
      %v607 = vperm.slane %v589, 0
      %609 = vmatpush.msra.mxu0 %v588
      %610 = vmatpush.msra.mxu0 %v587
      %611 = vmatpush.msra.mxu0 %v586
      %612 = vmatpush.msra.mxu0 %v585
      %613 = vmatpush.msra.mxu0 %v584
      %614 = vmatpush.msra.mxu0 %v583
      %615 = vmatpush.msra.mxu0 %v582
      %616 = vmatpush.msra.mxu0 %v581
      %617 = vmatpush.msra.mxu0 %v580
      %618 = vmatpush.msra.mxu0 %v579
      %619 = vmatpush.msra.mxu0 %v578
      %620 = vmatpush.msra.mxu0 %v577
      %621 = vmatpush.msra.mxu0 %v576
      %622 = vmatpush.msra.mxu0 %v575
      %623 = vmatpush.msra.mxu0 %v574
      %624 = vmatpush.msra.mxu0 %v573
      %625 = vmatmul.f32.gmra.mxu0 %v590
      %v626 = vpop.f32.mrf.mxu0
      %v627 = vadd.f32 %v607, %v626
      %628 = vmatmul.f32.gmra.mxu0 %v591
      %v629 = vpop.f32.mrf.mxu0
      %v630 = vadd.f32 %v607, %v629
      %631 = vmatmul.f32.gmra.mxu0 %v592
      %v632 = vpop.f32.mrf.mxu0
      %v633 = vadd.f32 %v607, %v632
      %634 = vmatmul.f32.gmra.mxu0 %v593
      %v635 = vpop.f32.mrf.mxu0
      %v636 = vadd.f32 %v607, %v635
      %637 = vmatmul.f32.gmra.mxu0 %v594
      %v638 = vpop.f32.mrf.mxu0
      %v639 = vadd.f32 %v607, %v638
      %640 = vmatmul.f32.gmra.mxu0 %v595
      %v641 = vpop.f32.mrf.mxu0
      %v642 = vadd.f32 %v607, %v641
      %643 = vmatmul.f32.gmra.mxu0 %v596
      %v644 = vpop.f32.mrf.mxu0
      %v645 = vadd.f32 %v607, %v644
      %646 = vmatmul.f32.gmra.mxu0 %v597
      %v647 = vpop.f32.mrf.mxu0
      %v648 = vadd.f32 %v607, %v647
      %649 = vmatmul.f32.gmra.mxu0 %v598
      %v650 = vpop.f32.mrf.mxu0
      %v651 = vadd.f32 %v607, %v650
      %652 = vmatmul.f32.gmra.mxu0 %v599
      %v653 = vpop.f32.mrf.mxu0
      %v654 = vadd.f32 %v607, %v653
      %655 = vmatmul.f32.gmra.mxu0 %v600
      %v656 = vpop.f32.mrf.mxu0
      %v657 = vadd.f32 %v607, %v656
      %658 = vmatmul.f32.gmra.mxu0 %v601
      %v659 = vpop.f32.mrf.mxu0
      %v660 = vadd.f32 %v607, %v659
      %661 = vmatmul.f32.gmra.mxu0 %v602
      %v662 = vpop.f32.mrf.mxu0
      %v663 = vadd.f32 %v607, %v662
      %664 = vmatmul.f32.gmra.mxu0 %v603
      %v665 = vpop.f32.mrf.mxu0
      %v666 = vadd.f32 %v607, %v665
      %667 = vmatmul.f32.gmra.mxu0 %v604
      %v668 = vpop.f32.mrf.mxu0
      %v669 = vadd.f32 %v607, %v668
      %670 = vmatmul.f32.gmra.mxu0 %v605
      %v671 = vpop.f32.mrf.mxu0
      %v672 = vadd.f32 %v607, %v671
      %673 = vdwg.mxu0
      %674 = vst [vmem:[#allocation9] sm:$0xff] %v627
      %675 = vst [vmem:[#allocation9 + $0x8] sm:$0xff] %v630
      %676 = vst [vmem:[#allocation9 + $0x10] sm:$0xff] %v633
      %677 = vst [vmem:[#allocation9 + $0x18] sm:$0xff] %v636
      %678 = vst [vmem:[#allocation9 + $0x20] sm:$0xff] %v639
      %679 = vst [vmem:[#allocation9 + $0x28] sm:$0xff] %v642
      %680 = vst [vmem:[#allocation9 + $0x30] sm:$0xff] %v645
      %681 = vst [vmem:[#allocation9 + $0x38] sm:$0xff] %v648
      %682 = vst [vmem:[#allocation9 + $0x40] sm:$0xff] %v651
      %683 = vst [vmem:[#allocation9 + $0x48] sm:$0xff] %v654
      %684 = vst [vmem:[#allocation9 + $0x50] sm:$0xff] %v657
      %685 = vst [vmem:[#allocation9 + $0x58] sm:$0xff] %v660
      %686 = vst [vmem:[#allocation9 + $0x60] sm:$0xff] %v663
      %687 = vst [vmem:[#allocation9 + $0x68] sm:$0xff] %v666
      %688 = vst [vmem:[#allocation9 + $0x70] sm:$0xff] %v669
      %689 = vst [vmem:[#allocation9 + $0x78] sm:$0xff] %v672
      %v690 = vld [vmem:[%s326] sm:$0xff]
      %v691 = vld [vmem:[%s326 + $0x8] sm:$0xff]
      %v692 = vld [vmem:[%s326 + $0x10] sm:$0xff]
      %v693 = vld [vmem:[%s326 + $0x18] sm:$0xff]
      %v694 = vld [vmem:[%s326 + $0x20] sm:$0xff]
      %v695 = vld [vmem:[%s326 + $0x28] sm:$0xff]
      %v696 = vld [vmem:[%s326 + $0x30] sm:$0xff]
      %v697 = vld [vmem:[%s326 + $0x38] sm:$0xff]
      %v698 = vld [vmem:[%s326 + $0x40] sm:$0xff]
      %v699 = vld [vmem:[%s326 + $0x48] sm:$0xff]
      %v700 = vld [vmem:[%s326 + $0x50] sm:$0xff]
      %v701 = vld [vmem:[%s326 + $0x58] sm:$0xff]
      %v702 = vld [vmem:[%s326 + $0x60] sm:$0xff]
      %v703 = vld [vmem:[%s326 + $0x68] sm:$0xff]
      %v704 = vld [vmem:[%s326 + $0x70] sm:$0xff]
      %v705 = vld [vmem:[%s326 + $0x78] sm:$0xff]
      %706 = vmatpush.msra.mxu0 %v588
      %707 = vmatpush.msra.mxu0 %v587
      %708 = vmatpush.msra.mxu0 %v586
      %709 = vmatpush.msra.mxu0 %v585
      %710 = vmatpush.msra.mxu0 %v584
      %711 = vmatpush.msra.mxu0 %v583
      %712 = vmatpush.msra.mxu0 %v582
      %713 = vmatpush.msra.mxu0 %v581
      %714 = vmatpush.msra.mxu0 %v580
      %715 = vmatpush.msra.mxu0 %v579
      %716 = vmatpush.msra.mxu0 %v578
      %717 = vmatpush.msra.mxu0 %v577
      %718 = vmatpush.msra.mxu0 %v576
      %719 = vmatpush.msra.mxu0 %v575
      %720 = vmatpush.msra.mxu0 %v574
      %721 = vmatpush.msra.mxu0 %v573
      %722 = vmatmul.f32.gmra.mxu0 %v690
      %v723 = vpop.f32.mrf.mxu0
      %v724 = vadd.f32 %v607, %v723
      %725 = vmatmul.f32.gmra.mxu0 %v691
      %v726 = vpop.f32.mrf.mxu0
      %v727 = vadd.f32 %v607, %v726
      %728 = vmatmul.f32.gmra.mxu0 %v692
      %v729 = vpop.f32.mrf.mxu0
      %v730 = vadd.f32 %v607, %v729
      %731 = vmatmul.f32.gmra.mxu0 %v693
      %v732 = vpop.f32.mrf.mxu0
      %v733 = vadd.f32 %v607, %v732
      %734 = vmatmul.f32.gmra.mxu0 %v694
      %v735 = vpop.f32.mrf.mxu0
      %v736 = vadd.f32 %v607, %v735
      %737 = vmatmul.f32.gmra.mxu0 %v695
      %v738 = vpop.f32.mrf.mxu0
      %v739 = vadd.f32 %v607, %v738
      %740 = vmatmul.f32.gmra.mxu0 %v696
      %v741 = vpop.f32.mrf.mxu0
      %v742 = vadd.f32 %v607, %v741
      %743 = vmatmul.f32.gmra.mxu0 %v697
      %v744 = vpop.f32.mrf.mxu0
      %v745 = vadd.f32 %v607, %v744
      %746 = vmatmul.f32.gmra.mxu0 %v698
      %v747 = vpop.f32.mrf.mxu0
      %v748 = vadd.f32 %v607, %v747
      %749 = vmatmul.f32.gmra.mxu0 %v699
      %v750 = vpop.f32.mrf.mxu0
      %v751 = vadd.f32 %v607, %v750
      %752 = vmatmul.f32.gmra.mxu0 %v700
      %v753 = vpop.f32.mrf.mxu0
      %v754 = vadd.f32 %v607, %v753
      %755 = vmatmul.f32.gmra.mxu0 %v701
      %v756 = vpop.f32.mrf.mxu0
      %v757 = vadd.f32 %v607, %v756
      %758 = vmatmul.f32.gmra.mxu0 %v702
      %v759 = vpop.f32.mrf.mxu0
      %v760 = vadd.f32 %v607, %v759
      %761 = vmatmul.f32.gmra.mxu0 %v703
      %v762 = vpop.f32.mrf.mxu0
      %v763 = vadd.f32 %v607, %v762
      %764 = vmatmul.f32.gmra.mxu0 %v704
      %v765 = vpop.f32.mrf.mxu0
      %v766 = vadd.f32 %v607, %v765
      %767 = vmatmul.f32.gmra.mxu0 %v705
      %v768 = vpop.f32.mrf.mxu0
      %v769 = vadd.f32 %v607, %v768
      %770 = vdwg.mxu0
      %s771 = scalar_lea.vmem [#allocation9], 128
      %772 = vst [vmem:[%s771] sm:$0xff] %v724
      %773 = vst [vmem:[%s771 + $0x8] sm:$0xff] %v727
      %774 = vst [vmem:[%s771 + $0x10] sm:$0xff] %v730
      %775 = vst [vmem:[%s771 + $0x18] sm:$0xff] %v733
      %776 = vst [vmem:[%s771 + $0x20] sm:$0xff] %v736
      %777 = vst [vmem:[%s771 + $0x28] sm:$0xff] %v739
      %778 = vst [vmem:[%s771 + $0x30] sm:$0xff] %v742
      %779 = vst [vmem:[%s771 + $0x38] sm:$0xff] %v745
      %780 = vst [vmem:[%s771 + $0x40] sm:$0xff] %v748
      %781 = vst [vmem:[%s771 + $0x48] sm:$0xff] %v751
      %782 = vst [vmem:[%s771 + $0x50] sm:$0xff] %v754
      %783 = vst [vmem:[%s771 + $0x58] sm:$0xff] %v757
      %784 = vst [vmem:[%s771 + $0x60] sm:$0xff] %v760
      %785 = vst [vmem:[%s771 + $0x68] sm:$0xff] %v763
      %786 = vst [vmem:[%s771 + $0x70] sm:$0xff] %v766
      %787 = vst [vmem:[%s771 + $0x78] sm:$0xff] %v769
    $region37: #{tpu_custom_call.1} parent=1 // pred_fallthru
      _
    // Predicated region
    $region38: #{tpu_custom_call.1} parent=1 // pred_check
      _
    $region39: #{tpu_custom_call.1} parent=1 // pred_check_branch
      %789 = sbr.rel (0) target = $region41
    $region40: #{tpu_custom_call.1} parent=1 // pred_region
      %791 = vsyncadd [#allocation5], 0
      %s792 = sshll.u32 [#allocation9], 4
      %s793 = int_to_ptr.vmem [resolvable:$true] %s792
      %s794 = sshll.u32 %s4, 4
      %s795 = int_to_ptr.hbm [resolvable:$true] %s794
      %800 = dma.vmem_to_hbm [thread:$0]  %s793, 4096, %s795, [#allocation5], 128, 128, 8
    $region41: #{tpu_custom_call.1} parent=1 // pred_fallthru
      _
    // Predicated region
    $region42: #{tpu_custom_call.1} parent=1 // pred_check
      _
    $region43: #{tpu_custom_call.1} parent=1 // pred_check_branch
      %802 = sbr.rel (0) target = $region45
    $region44: #{tpu_custom_call.1} parent=1 // pred_region
      %804 = dma.done [#allocation5], 4096
    $region45: #{tpu_custom_call.1} parent=1 // pred_fallthru
      _
    %805 = vsyncpa [#allocation4], 1
    %806 = vsyncpa [#allocation7], 1
    %807 = vsyncpa [#allocation5], 1

</llo_original>
